<compile_context>
chip_gen: v5e
topology: v5e:2x2
jax: 0.10.0
libtpu: 0.0.40
codegen_flags: <defaults>
</compile_context>

<pallas_src>
import functools

import jax
import jax.numpy as jnp
from jax import lax
from jax.experimental import pallas as pl
from jax.experimental.pallas import tpu as pltpu


# ----------------------- model hyper-parameters -----------------------------
MAX_LEN = 16        # LSTM input size
EMB_DIM = 32        # LSTM hidden size (E)
NUM_FEAT = 4        # F  (LSTM "batch" dim)
CLASS_N = 10
RATE = 0.1          # dropout rate (identity in eval mode)
FC_DIM = 1000       # rnn_fc output size (hard-coded 1000 in the module)
BATCH = 4           # B  (time axis of the LSTM)


# ------------------------------ kernel ---------------------------------------
def rnn_decoder_kernel(
    dec_inp_2d_ref,   # (B*F, MAX_LEN)
    enc_out_ref,      # (B, FC_DIM)
    w_ih_t_ref,       # (MAX_LEN, 4E)   = weight_ih_l0.T
    w_hh_t_ref,       # (E, 4E)         = weight_hh_l0.T
    b_lstm_ref,       # (1, 4E)         = bias_ih + bias_hh
    w_fin_enc_ref,    # (CLASS_N, FC_DIM) = final.weight[:, :1000]  (NOT transposed)
    w_comb_ref,       # (F, E, CLASS_N) = fused rnn_fc.weight.T @ final.weight[:,1000:].T
    b_comb_ref,       # (1, CLASS_N)    = fused bias
    out_ref,          # (B, CLASS_N)
    hid_scr,          # (B, F, E)  VMEM scratch (all LSTM hidden states)
    *,
    batch,
    num_feat,
    emb_dim,
):
    B, F, E = batch, num_feat, emb_dim

    # ---- hoisted input->hidden projection for ALL timesteps at once --------
    ih_gates = (
        jnp.dot(dec_inp_2d_ref[...], w_ih_t_ref[...],
                preferred_element_type=jnp.float32)
        + b_lstm_ref[...]
    )                                                      # (B*F, 4E)

    w_hh_t = w_hh_t_ref[...]                               # (E, 4E), loaded once

    # one full-width tanh + one full-width sigmoid, blended with a hoisted
    # lane-index mask (gate order i, f, g, o -> g occupies lanes [2E, 3E)).
    lane = lax.broadcasted_iota(jnp.int32, (F, 4 * E), 1)
    g_band = (lane >= 2 * E) & (lane < 3 * E)

    # ---- fully unrolled serial recurrence over B timesteps ------------------
    c = jnp.zeros((F, E), jnp.float32)
    h = jnp.zeros((F, E), jnp.float32)
    for t in range(B):
        gates = ih_gates[t * F:(t + 1) * F, :]             # (F, 4E)
        if t > 0:                                          # h == 0 at t == 0
            gates = gates + jnp.dot(h, w_hh_t,
                                    preferred_element_type=jnp.float32)
        act = jnp.where(g_band, jnp.tanh(gates), jax.nn.sigmoid(gates))
        i_g = act[:, 0 * E:1 * E]
        f_g = act[:, 1 * E:2 * E]
        g_g = act[:, 2 * E:3 * E]
        o_g = act[:, 3 * E:4 * E]
        c = f_g * c + i_g * g_g
        h = o_g * jnp.tanh(c)
        hid_scr[t] = h                                     # store timestep output

    # ---- fused (rnn_fc o final[:, 1000:]) : hidden.view(B, F*E) @ W_comb ----
    # Done as F tiny partial matmuls against (E, CLASS_N) blocks; f-major order
    # matches PyTorch's .view(B, -1) and avoids an in-kernel (B,F,E)->(B,F*E)
    # relayout.
    rnn_part = jnp.dot(hid_scr[:, 0, :], w_comb_ref[0],
                       preferred_element_type=jnp.float32)  # (B, CLASS_N)
    for f in range(1, F):
        rnn_part = rnn_part + jnp.dot(hid_scr[:, f, :], w_comb_ref[f],
                                      preferred_element_type=jnp.float32)

    # ---- enc_out @ final.weight[:, :1000].T  (trans_b on the MXU) -----------
    enc_part = lax.dot_general(
        enc_out_ref[...], w_fin_enc_ref[...],
        dimension_numbers=(((1,), (1,)), ((), ())),
        preferred_element_type=jnp.float32)                 # (B, CLASS_N)

    # Dropout = identity (eval mode).
    out_ref[...] = (enc_part + rnn_part + b_comb_ref[...]).astype(out_ref.dtype)


# ------------------------------ wrapper --------------------------------------
def rnn_decoder_forward(enc_out, dec_inp, params):
    B, F, L = dec_inp.shape
    E = EMB_DIM
    HI = jax.lax.Precision.HIGHEST

    w_ih, w_hh, b_ih, b_hh = (params["w_ih"], params["w_hh"],
                              params["b_ih"], params["b_hh"])
    w_fc, b_fc, w_fin, b_fin = (params["w_fc"], params["b_fc"],
                                params["w_fin"], params["b_fin"])

    # parameter plumbing (plain JAX glue)
    dec_inp_2d = dec_inp.reshape(B * F, L)                  # (B*F, MAX_LEN)
    w_ih_t = w_ih.T                                         # (MAX_LEN, 4E)
    w_hh_t = w_hh.T                                         # (E, 4E)
    b_lstm = (b_ih + b_hh).reshape(1, 4 * E)                # (1, 4E)

    w_fin_enc = w_fin[:, :FC_DIM]                           # (CLASS_N, FC_DIM)
    w_fin_rnn = w_fin[:, FC_DIM:]                           # (CLASS_N, FC_DIM)

    # Fold rnn_fc through the final layer (exact in eval mode: dropout between
    # them is identity and there is no nonlinearity).
    w_comb = jnp.matmul(w_fc.T, w_fin_rnn.T,
                        precision=HI).reshape(F, E, CLASS_N)  # (F, E, CLASS_N)
    b_comb = (jnp.matmul(b_fc, w_fin_rnn.T, precision=HI)
              + b_fin).reshape(1, CLASS_N)                    # (1, CLASS_N)

    vmem = pl.BlockSpec(memory_space=pltpu.MemorySpace.VMEM)
    kernel = functools.partial(rnn_decoder_kernel, batch=B, num_feat=F, emb_dim=E)

    # Single grid point: all operands (~170 KB) fit comfortably in VMEM.
    # TODO(synk): for many independent decoder instances, add a leading
    # "parallel" grid axis over instances (megacore / launch-overhead amortization).
    return pl.pallas_call(
        kernel,
        out_shape=jax.ShapeDtypeStruct((B, CLASS_N), jnp.float32),
        in_specs=[vmem] * 8,
        out_specs=vmem,
        scratch_shapes=[
            pltpu.VMEM((B, F, E), jnp.float32),             # all hidden states
        ],
    )(dec_inp_2d, enc_out, w_ih_t, w_hh_t, b_lstm, w_fin_enc, w_comb, b_comb)


# ------------------------- pure-JAX reference --------------------------------
def rnn_decoder_reference(enc_out, dec_inp, params):
    E = EMB_DIM
    B, F, _ = dec_inp.shape
    HI = jax.lax.Precision.HIGHEST
    w_ih, w_hh, b_ih, b_hh = (params["w_ih"], params["w_hh"],
                              params["b_ih"], params["b_hh"])

    def lstm_step(carry, x_t):
        h, c = carry
        gates = (jnp.matmul(x_t, w_ih.T, precision=HI)
                 + jnp.matmul(h, w_hh.T, precision=HI) + b_ih + b_hh)
        i_g = jax.nn.sigmoid(gates[:, 0 * E:1 * E])
        f_g = jax.nn.sigmoid(gates[:, 1 * E:2 * E])
        g_g = jnp.tanh(gates[:, 2 * E:3 * E])
        o_g = jax.nn.sigmoid(gates[:, 3 * E:4 * E])
        c_new = f_g * c + i_g * g_g
        h_new = o_g * jnp.tanh(c_new)
        return (h_new, c_new), h_new

    init = (jnp.zeros((F, E), jnp.float32), jnp.zeros((F, E), jnp.float32))
    _, hs = lax.scan(lstm_step, init, dec_inp)              # (B, F, E)
    hidden = hs.reshape(B, F * E)
    rnn_hidden = jnp.matmul(hidden, params["w_fc"].T, precision=HI) + params["b_fc"]
    concat = jnp.concatenate([enc_out, rnn_hidden], axis=1)
    return jnp.matmul(concat, params["w_fin"].T, precision=HI) + params["b_fin"]


# ------------------------------- main -----------------------------------------
if __name__ == "__main__":
    key = jax.random.PRNGKey(0)
    keys = jax.random.split(key, 12)
    E = EMB_DIM

    def init(k, shape, fan_in):
        return (jax.random.normal(k, shape, jnp.float32)
                / jnp.sqrt(fan_in)).astype(jnp.float32)

    params = {
        "w_ih": init(keys[0], (4 * E, MAX_LEN), MAX_LEN),
        "w_hh": init(keys[1], (4 * E, E), E),
        "b_ih": init(keys[2], (4 * E,), E),
        "b_hh": init(keys[3], (4 * E,), E),
        "w_fc": init(keys[4], (FC_DIM, NUM_FEAT * E), NUM_FEAT * E),
        "b_fc": init(keys[5], (FC_DIM,), NUM_FEAT * E),
        "w_fin": init(keys[6], (CLASS_N, 2 * FC_DIM), 2 * FC_DIM),
        "b_fin": init(keys[7], (CLASS_N,), 2 * FC_DIM),
    }

    dec_inp = jax.random.normal(keys[8], (BATCH, NUM_FEAT, MAX_LEN), jnp.float32)
    enc_out = jax.random.normal(keys[9], (BATCH, FC_DIM), jnp.float32)

    out = rnn_decoder_forward(enc_out, dec_inp, params)
    out = jax.block_until_ready(out)

    ref = rnn_decoder_reference(enc_out, dec_inp, params)
    assert out.shape == (BATCH, CLASS_N)
    # Slightly looser tolerance than 1e-3: the rnn_fc∘final fusion reassociates
    # the f32 accumulation order (exact math, different rounding).
    assert jnp.allclose(out, ref, atol=2e-3, rtol=2e-3), (
        f"max abs diff {jnp.max(jnp.abs(out - ref))}")

    print("KERNEL_OK")
</pallas_src>

<mosaic_0001>
module attributes {stable_mosaic.version = 11 : i64} {
  func.func @rnn_decoder_kernel(%arg0: memref<16x16xf32, #tpu.memory_space<vmem>>, %arg1: memref<4x1000xf32, #tpu.memory_space<vmem>>, %arg2: memref<16x128xf32, #tpu.memory_space<vmem>>, %arg3: memref<32x128xf32, #tpu.memory_space<vmem>>, %arg4: memref<1x128xf32, #tpu.memory_space<vmem>>, %arg5: memref<10x1000xf32, #tpu.memory_space<vmem>>, %arg6: memref<4x32x10xf32, #tpu.memory_space<vmem>>, %arg7: memref<1x10xf32, #tpu.memory_space<vmem>>, %arg8: memref<4x10xf32, #tpu.memory_space<vmem>>, %arg9: memref<4x4x32xf32, #tpu.memory_space<vmem>>) attributes {dimension_semantics = [], scalar_prefetch = 0 : i64, scratch_operands = 1 : i64, tpu.core_type = #tpu.core_type<tc>} {
    %c0 = arith.constant 0 : index
    %c0_0 = arith.constant 0 : index
    %0 = vector.load %arg0[%c0, %c0_0] : memref<16x16xf32, #tpu.memory_space<vmem>>, vector<16x16xf32>
    %c0_1 = arith.constant 0 : index
    %c0_2 = arith.constant 0 : index
    %1 = vector.load %arg2[%c0_1, %c0_2] : memref<16x128xf32, #tpu.memory_space<vmem>>, vector<16x128xf32>
    %cst = arith.constant dense<0.000000e+00> : vector<16x128xf32>
    %2 = tpu.matmul %0, %1, %cst {dimension_numbers = #tpu.dot_dimension_numbers<[1], [0], [0], [1], [0, 0, 1, 1], [], []>} : vector<16x16xf32>, vector<16x128xf32>, vector<16x128xf32> -> vector<16x128xf32>
    %c0_3 = arith.constant 0 : index
    %c0_4 = arith.constant 0 : index
    %3 = vector.load %arg4[%c0_3, %c0_4] : memref<1x128xf32, #tpu.memory_space<vmem>>, vector<1x128xf32>
    %4 = vector.broadcast %3 : vector<1x128xf32> to vector<16x128xf32>
    %5 = arith.addf %2, %4 : vector<16x128xf32>
    %c0_5 = arith.constant 0 : index
    %c0_6 = arith.constant 0 : index
    %6 = vector.load %arg3[%c0_5, %c0_6] : memref<32x128xf32, #tpu.memory_space<vmem>>, vector<32x128xf32>
    %7 = tpu.iota {dimensions = array<i32: 1>} : vector<4x128xi32>
    %c64_i32 = arith.constant 64 : i32
    %8 = vector.broadcast %c64_i32 : i32 to vector<4x128xi32>
    %9 = arith.cmpi sge, %7, %8 : vector<4x128xi32>
    %c96_i32 = arith.constant 96 : i32
    %10 = vector.broadcast %c96_i32 : i32 to vector<4x128xi32>
    %11 = arith.cmpi slt, %7, %10 : vector<4x128xi32>
    %12 = arith.andi %9, %11 : vector<4x128xi1>
    %cst_7 = arith.constant 0.000000e+00 : f32
    %13 = vector.broadcast %cst_7 : f32 to vector<4x32xf32>
    %14 = vector.extract_strided_slice %5 {offsets = [0, 0], sizes = [4, 128], strides = [1, 1]} : vector<16x128xf32> to vector<4x128xf32>
    %15 = math.tanh %14 : vector<4x128xf32>
    %16 = arith.negf %14 : vector<4x128xf32>
    %17 = math.exp %16 : vector<4x128xf32>
    %cst_8 = arith.constant 1.000000e+00 : f32
    %18 = vector.broadcast %cst_8 : f32 to vector<4x128xf32>
    %19 = arith.addf %18, %17 : vector<4x128xf32>
    %20 = arith.divf %18, %19 : vector<4x128xf32>
    %21 = arith.select %12, %15, %20 : vector<4x128xi1>, vector<4x128xf32>
    %22 = vector.extract_strided_slice %21 {offsets = [0, 0], sizes = [4, 32], strides = [1, 1]} : vector<4x128xf32> to vector<4x32xf32>
    %23 = vector.extract_strided_slice %21 {offsets = [0, 32], sizes = [4, 32], strides = [1, 1]} : vector<4x128xf32> to vector<4x32xf32>
    %24 = vector.extract_strided_slice %21 {offsets = [0, 64], sizes = [4, 32], strides = [1, 1]} : vector<4x128xf32> to vector<4x32xf32>
    %25 = vector.extract_strided_slice %21 {offsets = [0, 96], sizes = [4, 32], strides = [1, 1]} : vector<4x128xf32> to vector<4x32xf32>
    %26 = arith.mulf %23, %13 : vector<4x32xf32>
    %27 = arith.mulf %22, %24 : vector<4x32xf32>
    %28 = arith.addf %26, %27 : vector<4x32xf32>
    %29 = math.tanh %28 : vector<4x32xf32>
    %30 = arith.mulf %25, %29 : vector<4x32xf32>
    %c0_9 = arith.constant 0 : index
    %c0_10 = arith.constant 0 : index
    %c0_11 = arith.constant 0 : index
    %31 = vector.load %arg9[%c0_9, %c0_10, %c0_11] : memref<4x4x32xf32, #tpu.memory_space<vmem>>, vector<1x4x32xf32>
    %32 = vector.shape_cast %31 : vector<1x4x32xf32> to vector<4x32xf32>
    %33 = vector.shape_cast %30 : vector<4x32xf32> to vector<1x4x32xf32>
    tpu.vector_store %arg9[%c0_9, %c0_10, %c0_11], %33 {strides = array<i32>} : memref<4x4x32xf32, #tpu.memory_space<vmem>>, vector<1x4x32xf32>,
    %34 = vector.extract_strided_slice %5 {offsets = [4, 0], sizes = [4, 128], strides = [1, 1]} : vector<16x128xf32> to vector<4x128xf32>
    %cst_12 = arith.constant dense<0.000000e+00> : vector<4x128xf32>
    %35 = tpu.matmul %30, %6, %cst_12 {dimension_numbers = #tpu.dot_dimension_numbers<[1], [0], [0], [1], [0, 0, 1, 1], [], []>} : vector<4x32xf32>, vector<32x128xf32>, vector<4x128xf32> -> vector<4x128xf32>
    %36 = arith.addf %34, %35 : vector<4x128xf32>
    %37 = math.tanh %36 : vector<4x128xf32>
    %38 = arith.negf %36 : vector<4x128xf32>
    %39 = math.exp %38 : vector<4x128xf32>
    %cst_13 = arith.constant 1.000000e+00 : f32
    %40 = vector.broadcast %cst_13 : f32 to vector<4x128xf32>
    %41 = arith.addf %40, %39 : vector<4x128xf32>
    %42 = arith.divf %40, %41 : vector<4x128xf32>
    %43 = arith.select %12, %37, %42 : vector<4x128xi1>, vector<4x128xf32>
    %44 = vector.extract_strided_slice %43 {offsets = [0, 0], sizes = [4, 32], strides = [1, 1]} : vector<4x128xf32> to vector<4x32xf32>
    %45 = vector.extract_strided_slice %43 {offsets = [0, 32], sizes = [4, 32], strides = [1, 1]} : vector<4x128xf32> to vector<4x32xf32>
    %46 = vector.extract_strided_slice %43 {offsets = [0, 64], sizes = [4, 32], strides = [1, 1]} : vector<4x128xf32> to vector<4x32xf32>
    %47 = vector.extract_strided_slice %43 {offsets = [0, 96], sizes = [4, 32], strides = [1, 1]} : vector<4x128xf32> to vector<4x32xf32>
    %48 = arith.mulf %45, %28 : vector<4x32xf32>
    %49 = arith.mulf %44, %46 : vector<4x32xf32>
    %50 = arith.addf %48, %49 : vector<4x32xf32>
    %51 = math.tanh %50 : vector<4x32xf32>
    %52 = arith.mulf %47, %51 : vector<4x32xf32>
    %c1 = arith.constant 1 : index
    %c0_14 = arith.constant 0 : index
    %c0_15 = arith.constant 0 : index
    %53 = vector.load %arg9[%c1, %c0_14, %c0_15] : memref<4x4x32xf32, #tpu.memory_space<vmem>>, vector<1x4x32xf32>
    %54 = vector.shape_cast %53 : vector<1x4x32xf32> to vector<4x32xf32>
    %55 = vector.shape_cast %52 : vector<4x32xf32> to vector<1x4x32xf32>
    tpu.vector_store %arg9[%c1, %c0_14, %c0_15], %55 {strides = array<i32>} : memref<4x4x32xf32, #tpu.memory_space<vmem>>, vector<1x4x32xf32>,
    %56 = vector.extract_strided_slice %5 {offsets = [8, 0], sizes = [4, 128], strides = [1, 1]} : vector<16x128xf32> to vector<4x128xf32>
    %cst_16 = arith.constant dense<0.000000e+00> : vector<4x128xf32>
    %57 = tpu.matmul %52, %6, %cst_16 {dimension_numbers = #tpu.dot_dimension_numbers<[1], [0], [0], [1], [0, 0, 1, 1], [], []>} : vector<4x32xf32>, vector<32x128xf32>, vector<4x128xf32> -> vector<4x128xf32>
    %58 = arith.addf %56, %57 : vector<4x128xf32>
    %59 = math.tanh %58 : vector<4x128xf32>
    %60 = arith.negf %58 : vector<4x128xf32>
    %61 = math.exp %60 : vector<4x128xf32>
    %cst_17 = arith.constant 1.000000e+00 : f32
    %62 = vector.broadcast %cst_17 : f32 to vector<4x128xf32>
    %63 = arith.addf %62, %61 : vector<4x128xf32>
    %64 = arith.divf %62, %63 : vector<4x128xf32>
    %65 = arith.select %12, %59, %64 : vector<4x128xi1>, vector<4x128xf32>
    %66 = vector.extract_strided_slice %65 {offsets = [0, 0], sizes = [4, 32], strides = [1, 1]} : vector<4x128xf32> to vector<4x32xf32>
    %67 = vector.extract_strided_slice %65 {offsets = [0, 32], sizes = [4, 32], strides = [1, 1]} : vector<4x128xf32> to vector<4x32xf32>
    %68 = vector.extract_strided_slice %65 {offsets = [0, 64], sizes = [4, 32], strides = [1, 1]} : vector<4x128xf32> to vector<4x32xf32>
    %69 = vector.extract_strided_slice %65 {offsets = [0, 96], sizes = [4, 32], strides = [1, 1]} : vector<4x128xf32> to vector<4x32xf32>
    %70 = arith.mulf %67, %50 : vector<4x32xf32>
    %71 = arith.mulf %66, %68 : vector<4x32xf32>
    %72 = arith.addf %70, %71 : vector<4x32xf32>
    %73 = math.tanh %72 : vector<4x32xf32>
    %74 = arith.mulf %69, %73 : vector<4x32xf32>
    %c2 = arith.constant 2 : index
    %c0_18 = arith.constant 0 : index
    %c0_19 = arith.constant 0 : index
    %75 = vector.load %arg9[%c2, %c0_18, %c0_19] : memref<4x4x32xf32, #tpu.memory_space<vmem>>, vector<1x4x32xf32>
    %76 = vector.shape_cast %75 : vector<1x4x32xf32> to vector<4x32xf32>
    %77 = vector.shape_cast %74 : vector<4x32xf32> to vector<1x4x32xf32>
    tpu.vector_store %arg9[%c2, %c0_18, %c0_19], %77 {strides = array<i32>} : memref<4x4x32xf32, #tpu.memory_space<vmem>>, vector<1x4x32xf32>,
    %78 = vector.extract_strided_slice %5 {offsets = [12, 0], sizes = [4, 128], strides = [1, 1]} : vector<16x128xf32> to vector<4x128xf32>
    %cst_20 = arith.constant dense<0.000000e+00> : vector<4x128xf32>
    %79 = tpu.matmul %74, %6, %cst_20 {dimension_numbers = #tpu.dot_dimension_numbers<[1], [0], [0], [1], [0, 0, 1, 1], [], []>} : vector<4x32xf32>, vector<32x128xf32>, vector<4x128xf32> -> vector<4x128xf32>
    %80 = arith.addf %78, %79 : vector<4x128xf32>
    %81 = math.tanh %80 : vector<4x128xf32>
    %82 = arith.negf %80 : vector<4x128xf32>
    %83 = math.exp %82 : vector<4x128xf32>
    %cst_21 = arith.constant 1.000000e+00 : f32
    %84 = vector.broadcast %cst_21 : f32 to vector<4x128xf32>
    %85 = arith.addf %84, %83 : vector<4x128xf32>
    %86 = arith.divf %84, %85 : vector<4x128xf32>
    %87 = arith.select %12, %81, %86 : vector<4x128xi1>, vector<4x128xf32>
    %88 = vector.extract_strided_slice %87 {offsets = [0, 0], sizes = [4, 32], strides = [1, 1]} : vector<4x128xf32> to vector<4x32xf32>
    %89 = vector.extract_strided_slice %87 {offsets = [0, 32], sizes = [4, 32], strides = [1, 1]} : vector<4x128xf32> to vector<4x32xf32>
    %90 = vector.extract_strided_slice %87 {offsets = [0, 64], sizes = [4, 32], strides = [1, 1]} : vector<4x128xf32> to vector<4x32xf32>
    %91 = vector.extract_strided_slice %87 {offsets = [0, 96], sizes = [4, 32], strides = [1, 1]} : vector<4x128xf32> to vector<4x32xf32>
    %92 = arith.mulf %89, %72 : vector<4x32xf32>
    %93 = arith.mulf %88, %90 : vector<4x32xf32>
    %94 = arith.addf %92, %93 : vector<4x32xf32>
    %95 = math.tanh %94 : vector<4x32xf32>
    %96 = arith.mulf %91, %95 : vector<4x32xf32>
    %c3 = arith.constant 3 : index
    %c0_22 = arith.constant 0 : index
    %c0_23 = arith.constant 0 : index
    %97 = vector.load %arg9[%c3, %c0_22, %c0_23] : memref<4x4x32xf32, #tpu.memory_space<vmem>>, vector<1x4x32xf32>
    %98 = vector.shape_cast %97 : vector<1x4x32xf32> to vector<4x32xf32>
    %99 = vector.shape_cast %96 : vector<4x32xf32> to vector<1x4x32xf32>
    tpu.vector_store %arg9[%c3, %c0_22, %c0_23], %99 {strides = array<i32>} : memref<4x4x32xf32, #tpu.memory_space<vmem>>, vector<1x4x32xf32>,
    %c0_24 = arith.constant 0 : index
    %c0_25 = arith.constant 0 : index
    %c0_26 = arith.constant 0 : index
    %100 = vector.load %arg9[%c0_24, %c0_25, %c0_26] : memref<4x4x32xf32, #tpu.memory_space<vmem>>, vector<4x1x32xf32>
    %101 = vector.shape_cast %100 : vector<4x1x32xf32> to vector<4x32xf32>
    %c0_27 = arith.constant 0 : index
    %c0_28 = arith.constant 0 : index
    %c0_29 = arith.constant 0 : index
    %102 = vector.load %arg6[%c0_27, %c0_28, %c0_29] : memref<4x32x10xf32, #tpu.memory_space<vmem>>, vector<1x32x10xf32>
    %103 = vector.shape_cast %102 : vector<1x32x10xf32> to vector<32x10xf32>
    %cst_30 = arith.constant dense<0.000000e+00> : vector<4x10xf32>
    %104 = tpu.matmul %101, %103, %cst_30 {dimension_numbers = #tpu.dot_dimension_numbers<[1], [0], [0], [1], [0, 0, 1, 1], [], []>} : vector<4x32xf32>, vector<32x10xf32>, vector<4x10xf32> -> vector<4x10xf32>
    %c0_31 = arith.constant 0 : index
    %c1_32 = arith.constant 1 : index
    %c0_33 = arith.constant 0 : index
    %105 = vector.load %arg9[%c0_31, %c1_32, %c0_33] : memref<4x4x32xf32, #tpu.memory_space<vmem>>, vector<4x1x32xf32>
    %106 = vector.shape_cast %105 : vector<4x1x32xf32> to vector<4x32xf32>
    %c1_34 = arith.constant 1 : index
    %c0_35 = arith.constant 0 : index
    %c0_36 = arith.constant 0 : index
    %107 = vector.load %arg6[%c1_34, %c0_35, %c0_36] : memref<4x32x10xf32, #tpu.memory_space<vmem>>, vector<1x32x10xf32>
    %108 = vector.shape_cast %107 : vector<1x32x10xf32> to vector<32x10xf32>
    %cst_37 = arith.constant dense<0.000000e+00> : vector<4x10xf32>
    %109 = tpu.matmul %106, %108, %cst_37 {dimension_numbers = #tpu.dot_dimension_numbers<[1], [0], [0], [1], [0, 0, 1, 1], [], []>} : vector<4x32xf32>, vector<32x10xf32>, vector<4x10xf32> -> vector<4x10xf32>
    %110 = arith.addf %104, %109 : vector<4x10xf32>
    %c0_38 = arith.constant 0 : index
    %c2_39 = arith.constant 2 : index
    %c0_40 = arith.constant 0 : index
    %111 = vector.load %arg9[%c0_38, %c2_39, %c0_40] : memref<4x4x32xf32, #tpu.memory_space<vmem>>, vector<4x1x32xf32>
    %112 = vector.shape_cast %111 : vector<4x1x32xf32> to vector<4x32xf32>
    %c2_41 = arith.constant 2 : index
    %c0_42 = arith.constant 0 : index
    %c0_43 = arith.constant 0 : index
    %113 = vector.load %arg6[%c2_41, %c0_42, %c0_43] : memref<4x32x10xf32, #tpu.memory_space<vmem>>, vector<1x32x10xf32>
    %114 = vector.shape_cast %113 : vector<1x32x10xf32> to vector<32x10xf32>
    %cst_44 = arith.constant dense<0.000000e+00> : vector<4x10xf32>
    %115 = tpu.matmul %112, %114, %cst_44 {dimension_numbers = #tpu.dot_dimension_numbers<[1], [0], [0], [1], [0, 0, 1, 1], [], []>} : vector<4x32xf32>, vector<32x10xf32>, vector<4x10xf32> -> vector<4x10xf32>
    %116 = arith.addf %110, %115 : vector<4x10xf32>
    %c0_45 = arith.constant 0 : index
    %c3_46 = arith.constant 3 : index
    %c0_47 = arith.constant 0 : index
    %117 = vector.load %arg9[%c0_45, %c3_46, %c0_47] : memref<4x4x32xf32, #tpu.memory_space<vmem>>, vector<4x1x32xf32>
    %118 = vector.shape_cast %117 : vector<4x1x32xf32> to vector<4x32xf32>
    %c3_48 = arith.constant 3 : index
    %c0_49 = arith.constant 0 : index
    %c0_50 = arith.constant 0 : index
    %119 = vector.load %arg6[%c3_48, %c0_49, %c0_50] : memref<4x32x10xf32, #tpu.memory_space<vmem>>, vector<1x32x10xf32>
    %120 = vector.shape_cast %119 : vector<1x32x10xf32> to vector<32x10xf32>
    %cst_51 = arith.constant dense<0.000000e+00> : vector<4x10xf32>
    %121 = tpu.matmul %118, %120, %cst_51 {dimension_numbers = #tpu.dot_dimension_numbers<[1], [0], [0], [1], [0, 0, 1, 1], [], []>} : vector<4x32xf32>, vector<32x10xf32>, vector<4x10xf32> -> vector<4x10xf32>
    %122 = arith.addf %116, %121 : vector<4x10xf32>
    %c0_52 = arith.constant 0 : index
    %c0_53 = arith.constant 0 : index
    %123 = vector.load %arg1[%c0_52, %c0_53] : memref<4x1000xf32, #tpu.memory_space<vmem>>, vector<4x1000xf32>
    %c0_54 = arith.constant 0 : index
    %c0_55 = arith.constant 0 : index
    %124 = vector.load %arg5[%c0_54, %c0_55] : memref<10x1000xf32, #tpu.memory_space<vmem>>, vector<10x1000xf32>
    %cst_56 = arith.constant dense<0.000000e+00> : vector<4x10xf32>
    %125 = tpu.matmul %123, %124, %cst_56 {dimension_numbers = #tpu.dot_dimension_numbers<[1], [1], [0], [0], [0, 0, 1, 0], [], []>} : vector<4x1000xf32>, vector<10x1000xf32>, vector<4x10xf32> -> vector<4x10xf32>
    %126 = arith.addf %125, %122 : vector<4x10xf32>
    %c0_57 = arith.constant 0 : index
    %c0_58 = arith.constant 0 : index
    %127 = vector.load %arg7[%c0_57, %c0_58] : memref<1x10xf32, #tpu.memory_space<vmem>>, vector<1x10xf32>
    %128 = vector.broadcast %127 : vector<1x10xf32> to vector<4x10xf32>
    %129 = arith.addf %126, %128 : vector<4x10xf32>
    %c0_59 = arith.constant 0 : index
    %c0_60 = arith.constant 0 : index
    %130 = vector.load %arg8[%c0_59, %c0_60] : memref<4x10xf32, #tpu.memory_space<vmem>>, vector<4x10xf32>
    tpu.vector_store %arg8[%c0_59, %c0_60], %129 {strides = array<i32>} : memref<4x10xf32, #tpu.memory_space<vmem>>, vector<4x10xf32>,
    return
  }
}

</mosaic_0001>

<llo_original>
// kernel: tpu_custom_call.1
$region0: #{tpu_custom_call.1}
  #allocation0 [shape = 'u32[]', space=smem, size = 0x4, offset = 0x4, fixed_abs, tag = 'smem constant byte address 0x4 - core index']
  #allocation1 [shape = 'u32[72,128]{1,0:T(1,128)}', space=vmem, size = 0x9000, scoped, tag = 'internal scratch']
  #allocation2 [shape = 'f32[4,4,32]{2,1,0:T(4,128)}', space=vmem, size = 0x2000, scoped, tag = 'scratch operand']
  %s0 = inlined_call_operand.hbm [shape: f32[16,16], index: 0, kind: input, shape index: {}]
  %s1 = inlined_call_operand.vmem [shape: f32[4,1000], index: 1, kind: input, shape index: {}]
  %s2 = inlined_call_operand.hbm [shape: f32[16,128], index: 2, kind: input, shape index: {}]
  %s3 = inlined_call_operand.hbm [shape: f32[32,128], index: 3, kind: input, shape index: {}]
  %s4 = inlined_call_operand.vmem [shape: f32[1,128], index: 4, kind: input, shape index: {}]
  %s5 = inlined_call_operand.vmem [shape: f32[10,1000], index: 5, kind: input, shape index: {}]
  %s6 = inlined_call_operand.vmem [shape: f32[4,32,10], index: 6, kind: input, shape index: {}]
  %s7 = inlined_call_operand.vmem [shape: f32[1,10], index: 7, kind: input, shape index: {}]
  %s8 = inlined_call_operand.hbm [shape: f32[4,10], index: 8, kind: output, shape index: {}]
  %s9 = sld [smem:[#allocation0]]
  $region54: #{tpu_custom_call.1} parent=0
    _
  %s11 = ssub.s32 1, %s9
  %s12 = scalar_select 0, %s11, %s9
  $region1: #{tpu_custom_call.1} parent=0
    #allocation3 [shape = 'u8[8192]{0}', space=vmem, size = 0x2000, scoped, tag = 'input window, operand 0, single buffered']
    #allocation4 [shape = 's32[1]{0}', space=sflag, size = 0x4, scoped, tag = 'scoped memory for tpu_custom_call.1']
    #allocation5 [shape = 's32[1]{0}', space=sflag, size = 0x4, scoped, tag = 'scoped memory for tpu_custom_call.1']
    #allocation6 [shape = 'u8[8192]{0}', space=vmem, size = 0x2000, scoped, tag = 'input window, operand 2, single buffered']
    #allocation7 [shape = 's32[1]{0}', space=sflag, size = 0x4, scoped, tag = 'scoped memory for tpu_custom_call.1']
    #allocation8 [shape = 'u8[16384]{0}', space=vmem, size = 0x4000, scoped, tag = 'input window, operand 3, single buffered']
    #allocation9 [shape = 'u8[2048]{0}', space=vmem, size = 0x800, scoped, tag = 'output window, operand 0, single buffered']
    %13 = vsyncpa [#allocation4], 0
    %14 = vsyncpa [#allocation7], 0
    %15 = vsyncpa [#allocation5], 0
    // Predicated region
    $region2: #{tpu_custom_call.1} parent=1 // pred_check
      _
    $region3: #{tpu_custom_call.1} parent=1 // pred_check_branch
      %17 = sbr.rel (0) target = $region5
    $region4: #{tpu_custom_call.1} parent=1 // pred_region
      %19 = vsyncadd [#allocation4], 0
      %s20 = sshll.u32 %s0, 4
      %s21 = int_to_ptr.hbm [resolvable:$true] %s20
      %s22 = sshll.u32 [#allocation3], 4
      %s23 = int_to_ptr.vmem [resolvable:$true] %s22
      %28 = dma.hbm_to_vmem [thread:$0]  %s21, 256, %s23, [#allocation4], 128, 128, 8
    $region5: #{tpu_custom_call.1} parent=1 // pred_fallthru
      _
    // Predicated region
    $region6: #{tpu_custom_call.1} parent=1 // pred_check
      _
    $region7: #{tpu_custom_call.1} parent=1 // pred_check_branch
      %30 = sbr.rel (0) target = $region9
    $region8: #{tpu_custom_call.1} parent=1 // pred_region
      _
    $region9: #{tpu_custom_call.1} parent=1 // pred_fallthru
      _
    // Predicated region
    $region10: #{tpu_custom_call.1} parent=1 // pred_check
      _
    $region11: #{tpu_custom_call.1} parent=1 // pred_check_branch
      %32 = sbr.rel (0) target = $region13
    $region12: #{tpu_custom_call.1} parent=1 // pred_region
      %34 = vsyncadd [#allocation7], 0
      %s35 = sshll.u32 %s2, 4
      %s36 = int_to_ptr.hbm [resolvable:$true] %s35
      %s37 = sshll.u32 [#allocation6], 4
      %s38 = int_to_ptr.vmem [resolvable:$true] %s37
      %43 = dma.hbm_to_vmem [thread:$0]  %s36, 256, %s38, [#allocation7], 128, 128, 8
    $region13: #{tpu_custom_call.1} parent=1 // pred_fallthru
      _
    // Predicated region
    $region14: #{tpu_custom_call.1} parent=1 // pred_check
      _
    $region15: #{tpu_custom_call.1} parent=1 // pred_check_branch
      %45 = sbr.rel (0) target = $region17
    $region16: #{tpu_custom_call.1} parent=1 // pred_region
      %47 = vsyncadd [#allocation7], 0
      %s48 = sshll.u32 %s3, 4
      %s49 = int_to_ptr.hbm [resolvable:$true] %s48
      %s50 = sshll.u32 [#allocation8], 4
      %s51 = int_to_ptr.vmem [resolvable:$true] %s50
      %56 = dma.hbm_to_vmem [thread:$0]  %s49, 512, %s51, [#allocation7], 128, 128, 8
    $region17: #{tpu_custom_call.1} parent=1 // pred_fallthru
      _
    // Predicated region
    $region18: #{tpu_custom_call.1} parent=1 // pred_check
      _
    $region19: #{tpu_custom_call.1} parent=1 // pred_check_branch
      %58 = sbr.rel (0) target = $region21
    $region20: #{tpu_custom_call.1} parent=1 // pred_region
      _
    $region21: #{tpu_custom_call.1} parent=1 // pred_fallthru
      _
    // Predicated region
    $region22: #{tpu_custom_call.1} parent=1 // pred_check
      _
    $region23: #{tpu_custom_call.1} parent=1 // pred_check_branch
      %60 = sbr.rel (0) target = $region25
    $region24: #{tpu_custom_call.1} parent=1 // pred_region
      _
    $region25: #{tpu_custom_call.1} parent=1 // pred_fallthru
      _
    // Predicated region
    $region26: #{tpu_custom_call.1} parent=1 // pred_check
      _
    $region27: #{tpu_custom_call.1} parent=1 // pred_check_branch
      %62 = sbr.rel (0) target = $region29
    $region28: #{tpu_custom_call.1} parent=1 // pred_region
      _
    $region29: #{tpu_custom_call.1} parent=1 // pred_fallthru
      _
    // Predicated region
    $region30: #{tpu_custom_call.1} parent=1 // pred_check
      _
    $region31: #{tpu_custom_call.1} parent=1 // pred_check_branch
      %64 = sbr.rel (0) target = $region33
    $region32: #{tpu_custom_call.1} parent=1 // pred_region
      _
    $region33: #{tpu_custom_call.1} parent=1 // pred_fallthru
      _
    // Predicated region
    $region34: #{tpu_custom_call.1} parent=1 // pred_check
      _
    $region35: #{tpu_custom_call.1} parent=1 // pred_check_branch
      %66 = sbr.rel (0) target = $region37
    $region36: #{tpu_custom_call.1} parent=1 // pred_region
      %68 = dma.done [#allocation4], 256
    $region37: #{tpu_custom_call.1} parent=1 // pred_fallthru
      _
    // Predicated region
    $region38: #{tpu_custom_call.1} parent=1 // pred_check
      _
    $region39: #{tpu_custom_call.1} parent=1 // pred_check_branch
      %70 = sbr.rel (0) target = $region41
    $region40: #{tpu_custom_call.1} parent=1 // pred_region
      %72 = dma.done [#allocation7], 256
    $region41: #{tpu_custom_call.1} parent=1 // pred_fallthru
      _
    // Predicated region
    $region42: #{tpu_custom_call.1} parent=1 // pred_check
      _
    $region43: #{tpu_custom_call.1} parent=1 // pred_check_branch
      %74 = sbr.rel (0) target = $region45
    $region44: #{tpu_custom_call.1} parent=1 // pred_region
      %76 = dma.done [#allocation7], 512
    $region45: #{tpu_custom_call.1} parent=1 // pred_fallthru
      _
    %v77 = vld [vmem:[#allocation3] sm:$0xff]
    %v78 = vld [vmem:[#allocation3 + $0x8] sm:$0xff]
    %v79 = vld [vmem:[#allocation6] sm:$0xff]
    %v80 = vld [vmem:[#allocation6 + $0x8] sm:$0xff]
    %v81 = vld [vmem:[%s4] sm:$0x1]
    %v83 = vperm.slane %v81, 0
    %vm85 = vcmask 130048
    %v87 = vsel %vm85, %v77, 0
    %v90 = vsel %vm85, %v78, 0
    %92 = vmatpush.msra.mxu0 0.0
    %93 = vmatpush.msra.mxu0 0.0
    %94 = vmatpush.msra.mxu0 0.0
    %95 = vmatpush.msra.mxu0 0.0
    %96 = vmatpush.msra.mxu0 0.0
    %97 = vmatpush.msra.mxu0 0.0
    %98 = vmatpush.msra.mxu0 0.0
    %99 = vmatpush.msra.mxu0 0.0
    %100 = vmatpush.msra.mxu0 0.0
    %101 = vmatpush.msra.mxu0 0.0
    %102 = vmatpush.msra.mxu0 0.0
    %103 = vmatpush.msra.mxu0 0.0
    %104 = vmatpush.msra.mxu0 0.0
    %105 = vmatpush.msra.mxu0 0.0
    %106 = vmatpush.msra.mxu0 %v80
    %107 = vmatpush.msra.mxu0 %v79
    %108 = vmatmul.f32.gmra.mxu0 %v87
    %v109 = vpop.f32.mrf.mxu0
    %v110 = vadd.f32 %v83, %v109
    %111 = vmatmul.f32.gmra.mxu0 %v90
    %v112 = vpop.f32.mrf.mxu0
    %v113 = vadd.f32 %v83, %v112
    %114 = vdwg.mxu0
    %v115 = vld [vmem:[#allocation8] sm:$0xff]
    %v116 = vld [vmem:[#allocation8 + $0x8] sm:$0xff]
    %v117 = vld [vmem:[#allocation8 + $0x10] sm:$0xff]
    %v118 = vld [vmem:[#allocation8 + $0x18] sm:$0xff]
    %v119 = vlaneseq
    %v120 = vand.u32 %v119, 127
    %vm121 = vcmp.ge.s32.totalorder %v120, 64
    %vm122 = vcmp.lt.s32.totalorder %v120, 96
    %vm123 = vmand %vm121, %vm122
    %v124 = vtanh.pop %v110
    %v125 = vxor.u32 %v110, 2147483648
    %v126 = vmul.f32 %v125, 1.442695
    %v127 = vpow.pop %v126
    %v128 = vadd.f32 %v127, 1.0
    %v129 = vrcp.pop %v128
    %v130 = vmul.f32 %v128, %v129
    %v131 = vsub.f32 1.0, %v130
    %v132 = vmul.f32 %v129, %v131
    %v133 = vadd.f32 %v129, %v132
    %vm134 = vweird.f32 %v128
    %vm135 = vweird.f32 %v129
    %vm136 = vmor %vm134, %vm135
    %v137 = vsel %vm136, %v129, %v133
    %v138 = vand.u32 2147483647, %v128
    %vm139 = vcmp.eq.f32.partialorder %v138, 8.507059e+37
    %v140 = vand.u32 %v128, 2147483648
    %v141 = vor.u32 1.1754944e-38, %v140
    %v142 = vsel %vm139, %v141, %v137
    %v143 = vmul.f32 1.0, %v142
    %v144 = vsel %vm123, %v124, %v143
    %v145 = vmul.f32 %v144, 0.0
    %147 = vrot.lane.b32.xlu0 %v144, 64
    %v148 = vpop.permute.xlu0 %147
    %v150 = vmul.f32 %v144, %v148
    %152 = vrot.lane.b32.xlu0 %v150, 32
    %v153 = vpop.permute.xlu0 %152
    %v155 = vadd.f32 %v145, %v153
    %v156 = vtanh.pop %v155
    %158 = vrot.lane.b32.xlu0 %v156, 64
    %v159 = vpop.permute.xlu0 %158
    %v161 = vmul.f32 %v144, %v159
    %163 = vrot.lane.b32.xlu0 %v161, 32
    %v164 = vpop.permute.xlu0 %163
    %vm166 = vcmask 257024
    %167 = vst.msk [vmem:[#allocation2] sm:$0xf] %vm166, %v164
    %vm168 = vcmask 261120
    %v169 = vsel %vm168, %v164, 0
    %171 = vmatpush.msra.mxu0 0.0
    %172 = vmatpush.msra.mxu0 0.0
    %173 = vmatpush.msra.mxu0 0.0
    %174 = vmatpush.msra.mxu0 0.0
    %175 = vmatpush.msra.mxu0 0.0
    %176 = vmatpush.msra.mxu0 0.0
    %177 = vmatpush.msra.mxu0 0.0
    %178 = vmatpush.msra.mxu0 0.0
    %179 = vmatpush.msra.mxu0 0.0
    %180 = vmatpush.msra.mxu0 0.0
    %181 = vmatpush.msra.mxu0 0.0
    %182 = vmatpush.msra.mxu0 0.0
    %183 = vmatpush.msra.mxu0 %v118
    %184 = vmatpush.msra.mxu0 %v117
    %185 = vmatpush.msra.mxu0 %v116
    %186 = vmatpush.msra.mxu0 %v115
    %187 = vmatmul.f32.gmra.mxu0 %v169
    %v188 = vpop.f32.mrf.mxu0
    %v189 = vadd.f32 0.0, %v188
    %190 = vdwg.mxu0
    %v192 = vrot.slane %v189, 4
    %v194 = vadd.f32 %v110, %v192
    %v195 = vtanh.pop %v194
    %v196 = vxor.u32 %v194, 2147483648
    %v197 = vmul.f32 %v196, 1.442695
    %v198 = vpow.pop %v197
    %v199 = vadd.f32 %v198, 1.0
    %v200 = vrcp.pop %v199
    %v201 = vmul.f32 %v199, %v200
    %v202 = vsub.f32 1.0, %v201
    %v203 = vmul.f32 %v200, %v202
    %v204 = vadd.f32 %v200, %v203
    %vm205 = vweird.f32 %v199
    %vm206 = vweird.f32 %v200
    %vm207 = vmor %vm205, %vm206
    %v208 = vsel %vm207, %v200, %v204
    %v209 = vand.u32 2147483647, %v199
    %vm210 = vcmp.eq.f32.partialorder %v209, 8.507059e+37
    %v211 = vand.u32 %v199, 2147483648
    %v212 = vor.u32 1.1754944e-38, %v211
    %v213 = vsel %vm210, %v212, %v208
    %v214 = vmul.f32 1.0, %v213
    %v215 = vsel %vm123, %v195, %v214
    %v217 = vrot.slane %v155, 4
    %v219 = vmul.f32 %v215, %v217
    %221 = vrot.lane.b32.xlu0 %v215, 64
    %v222 = vpop.permute.xlu0 %221
    %v224 = vmul.f32 %v215, %v222
    %226 = vrot.lane.b32.xlu0 %v224, 32
    %v227 = vpop.permute.xlu0 %226
    %v229 = vadd.f32 %v219, %v227
    %v230 = vtanh.pop %v229
    %232 = vrot.lane.b32.xlu0 %v230, 64
    %v233 = vpop.permute.xlu0 %232
    %v235 = vmul.f32 %v215, %v233
    %237 = vrot.lane.b32.xlu0 %v235, 32
    %v238 = vpop.permute.xlu0 %237
    %s240 = scalar_lea.vmem [#allocation2], 4
    %vm241 = vcmask 261124
    %242 = vst.msk [vmem:[%s240 - $0x4] sm:$0xf0] %vm241, %v238
    %v243 = vrot.slane %v235, 4
    %244 = vrot.lane.b32.xlu0 %v243, 32
    %v245 = vpop.permute.xlu0 %244
    %v246 = vsel %vm168, %v245, 0
    %248 = vmatpush.msra.mxu0 0.0
    %249 = vmatpush.msra.mxu0 0.0
    %250 = vmatpush.msra.mxu0 0.0
    %251 = vmatpush.msra.mxu0 0.0
    %252 = vmatpush.msra.mxu0 0.0
    %253 = vmatpush.msra.mxu0 0.0
    %254 = vmatpush.msra.mxu0 0.0
    %255 = vmatpush.msra.mxu0 0.0
    %256 = vmatpush.msra.mxu0 0.0
    %257 = vmatpush.msra.mxu0 0.0
    %258 = vmatpush.msra.mxu0 0.0
    %259 = vmatpush.msra.mxu0 0.0
    %260 = vmatpush.msra.mxu0 %v118
    %261 = vmatpush.msra.mxu0 %v117
    %262 = vmatpush.msra.mxu0 %v116
    %263 = vmatpush.msra.mxu0 %v115
    %264 = vmatmul.f32.gmra.mxu0 %v246
    %v265 = vpop.f32.mrf.mxu0
    %v266 = vadd.f32 0.0, %v265
    %267 = vdwg.mxu0
    %v268 = vadd.f32 %v113, %v266
    %v269 = vtanh.pop %v268
    %v270 = vxor.u32 %v268, 2147483648
    %v271 = vmul.f32 %v270, 1.442695
    %v272 = vpow.pop %v271
    %v273 = vadd.f32 %v272, 1.0
    %v274 = vrcp.pop %v273
    %v275 = vmul.f32 %v273, %v274
    %v276 = vsub.f32 1.0, %v275
    %v277 = vmul.f32 %v274, %v276
    %v278 = vadd.f32 %v274, %v277
    %vm279 = vweird.f32 %v273
    %vm280 = vweird.f32 %v274
    %vm281 = vmor %vm279, %vm280
    %v282 = vsel %vm281, %v274, %v278
    %v283 = vand.u32 2147483647, %v273
    %vm284 = vcmp.eq.f32.partialorder %v283, 8.507059e+37
    %v285 = vand.u32 %v273, 2147483648
    %v286 = vor.u32 1.1754944e-38, %v285
    %v287 = vsel %vm284, %v286, %v282
    %v288 = vmul.f32 1.0, %v287
    %v289 = vsel %vm123, %v269, %v288
    %v291 = vrot.slane %v229, 4
    %v293 = vmul.f32 %v289, %v291
    %295 = vrot.lane.b32.xlu0 %v289, 64
    %v296 = vpop.permute.xlu0 %295
    %v298 = vmul.f32 %v289, %v296
    %300 = vrot.lane.b32.xlu0 %v298, 32
    %v301 = vpop.permute.xlu0 %300
    %v303 = vadd.f32 %v293, %v301
    %v304 = vtanh.pop %v303
    %306 = vrot.lane.b32.xlu0 %v304, 64
    %v307 = vpop.permute.xlu0 %306
    %v309 = vmul.f32 %v289, %v307
    %311 = vrot.lane.b32.xlu0 %v309, 32
    %v312 = vpop.permute.xlu0 %311
    %s314 = scalar_lea.vmem [#allocation2], 8
    %315 = vst.msk [vmem:[%s314] sm:$0xf] %vm166, %v312
    %v316 = vsel %vm168, %v312, 0
    %318 = vmatpush.msra.mxu0 0.0
    %319 = vmatpush.msra.mxu0 0.0
    %320 = vmatpush.msra.mxu0 0.0
    %321 = vmatpush.msra.mxu0 0.0
    %322 = vmatpush.msra.mxu0 0.0
    %323 = vmatpush.msra.mxu0 0.0
    %324 = vmatpush.msra.mxu0 0.0
    %325 = vmatpush.msra.mxu0 0.0
    %326 = vmatpush.msra.mxu0 0.0
    %327 = vmatpush.msra.mxu0 0.0
    %328 = vmatpush.msra.mxu0 0.0
    %329 = vmatpush.msra.mxu0 0.0
    %330 = vmatpush.msra.mxu0 %v118
    %331 = vmatpush.msra.mxu0 %v117
    %332 = vmatpush.msra.mxu0 %v116
    %333 = vmatpush.msra.mxu0 %v115
    %334 = vmatmul.f32.gmra.mxu0 %v316
    %v335 = vpop.f32.mrf.mxu0
    %v336 = vadd.f32 0.0, %v335
    %337 = vdwg.mxu0
    %v339 = vrot.slane %v336, 4
    %v341 = vadd.f32 %v113, %v339
    %v342 = vtanh.pop %v341
    %v343 = vxor.u32 %v341, 2147483648
    %v344 = vmul.f32 %v343, 1.442695
    %v345 = vpow.pop %v344
    %v346 = vadd.f32 %v345, 1.0
    %v347 = vrcp.pop %v346
    %v348 = vmul.f32 %v346, %v347
    %v349 = vsub.f32 1.0, %v348
    %v350 = vmul.f32 %v347, %v349
    %v351 = vadd.f32 %v347, %v350
    %vm352 = vweird.f32 %v346
    %vm353 = vweird.f32 %v347
    %vm354 = vmor %vm352, %vm353
    %v355 = vsel %vm354, %v347, %v351
    %v356 = vand.u32 2147483647, %v346
    %vm357 = vcmp.eq.f32.partialorder %v356, 8.507059e+37
    %v358 = vand.u32 %v346, 2147483648
    %v359 = vor.u32 1.1754944e-38, %v358
    %v360 = vsel %vm357, %v359, %v355
    %v361 = vmul.f32 1.0, %v360
    %v362 = vsel %vm123, %v342, %v361
    %v364 = vrot.slane %v303, 4
    %v366 = vmul.f32 %v362, %v364
    %368 = vrot.lane.b32.xlu0 %v362, 64
    %v369 = vpop.permute.xlu0 %368
    %v371 = vmul.f32 %v362, %v369
    %373 = vrot.lane.b32.xlu0 %v371, 32
    %v374 = vpop.permute.xlu0 %373
    %v376 = vadd.f32 %v366, %v374
    %v377 = vtanh.pop %v376
    %379 = vrot.lane.b32.xlu0 %v377, 64
    %v380 = vpop.permute.xlu0 %379
    %v382 = vmul.f32 %v362, %v380
    %384 = vrot.lane.b32.xlu0 %v382, 32
    %v385 = vpop.permute.xlu0 %384
    %s387 = scalar_lea.vmem [#allocation2], 12
    %388 = vst.msk [vmem:[%s387 - $0x4] sm:$0xf0] %vm241, %v385
    %v389 = vld [vmem:[#allocation2] sm:$0x1]
    %v390 = vld [vmem:[#allocation2 + $0x4] sm:$0x1]
    %v391 = vld [vmem:[#allocation2 + $0x8] sm:$0x1]
    %v392 = vld [vmem:[#allocation2 + $0xc] sm:$0x1]
    %v393 = vld [vmem:[%s6] sm:$0xff]
    %v394 = vld [vmem:[%s6 + $0x8] sm:$0xff]
    %v395 = vld [vmem:[%s6 + $0x10] sm:$0xff]
    %v396 = vld [vmem:[%s6 + $0x18] sm:$0xff]
    %v397 = vld [vmem:[#allocation2 + $0x1] sm:$0x1]
    %v398 = vld [vmem:[#allocation2 + $0x5] sm:$0x1]
    %v399 = vld [vmem:[#allocation2 + $0x9] sm:$0x1]
    %v400 = vld [vmem:[#allocation2 + $0xd] sm:$0x1]
    %s401 = scalar_lea.vmem %s6, 32
    %v402 = vld [vmem:[%s401] sm:$0xff]
    %v403 = vld [vmem:[%s401 + $0x8] sm:$0xff]
    %v404 = vld [vmem:[%s401 + $0x10] sm:$0xff]
    %v405 = vld [vmem:[%s401 + $0x18] sm:$0xff]
    %v410 = vrot.slane %v398, 7
    %vm411 = vcmask 1041409
    %v412 = vsel %vm411, %v410, %v397
    %v413 = vrot.slane %v399, 6
    %vm414 = vcmask 1042434
    %v415 = vsel %vm414, %v413, %v412
    %v416 = vrot.slane %v400, 5
    %vm417 = vcmask 1043459
    %v418 = vsel %vm417, %v416, %v415
    %v419 = vsel %vm168, %v418, 0
    %421 = vmatpush.msra.mxu0 0.0
    %422 = vmatpush.msra.mxu0 0.0
    %423 = vmatpush.msra.mxu0 0.0
    %424 = vmatpush.msra.mxu0 0.0
    %425 = vmatpush.msra.mxu0 0.0
    %426 = vmatpush.msra.mxu0 0.0
    %427 = vmatpush.msra.mxu0 0.0
    %428 = vmatpush.msra.mxu0 0.0
    %429 = vmatpush.msra.mxu0 0.0
    %430 = vmatpush.msra.mxu0 0.0
    %431 = vmatpush.msra.mxu0 0.0
    %432 = vmatpush.msra.mxu0 0.0
    %433 = vmatpush.msra.mxu0 %v405
    %434 = vmatpush.msra.mxu0 %v404
    %435 = vmatpush.msra.mxu0 %v403
    %436 = vmatpush.msra.mxu0 %v402
    %437 = vmatmul.f32.gmra.mxu0 %v419
    %v438 = vpop.f32.mrf.mxu0
    %v439 = vadd.f32 0.0, %v438
    %440 = vdwg.mxu0
    %v445 = vrot.slane %v390, 7
    %v446 = vsel %vm411, %v445, %v389
    %v447 = vrot.slane %v391, 6
    %v448 = vsel %vm414, %v447, %v446
    %v449 = vrot.slane %v392, 5
    %v450 = vsel %vm417, %v449, %v448
    %v451 = vsel %vm168, %v450, 0
    %453 = vmatpush.msra.mxu0 0.0
    %454 = vmatpush.msra.mxu0 0.0
    %455 = vmatpush.msra.mxu0 0.0
    %456 = vmatpush.msra.mxu0 0.0
    %457 = vmatpush.msra.mxu0 0.0
    %458 = vmatpush.msra.mxu0 0.0
    %459 = vmatpush.msra.mxu0 0.0
    %460 = vmatpush.msra.mxu0 0.0
    %461 = vmatpush.msra.mxu0 0.0
    %462 = vmatpush.msra.mxu0 0.0
    %463 = vmatpush.msra.mxu0 0.0
    %464 = vmatpush.msra.mxu0 0.0
    %465 = vmatpush.msra.mxu0 %v396
    %466 = vmatpush.msra.mxu0 %v395
    %467 = vmatpush.msra.mxu0 %v394
    %468 = vmatpush.msra.mxu0 %v393
    %469 = vmatmul.f32.gmra.mxu0 %v451
    %v470 = vpop.f32.mrf.mxu0
    %v471 = vadd.f32 %v439, %v470
    %472 = vdwg.mxu0
    %v473 = vld [vmem:[#allocation2 + $0x2] sm:$0x1]
    %v474 = vld [vmem:[#allocation2 + $0x6] sm:$0x1]
    %v475 = vld [vmem:[#allocation2 + $0xa] sm:$0x1]
    %v476 = vld [vmem:[#allocation2 + $0xe] sm:$0x1]
    %s477 = scalar_lea.vmem %s6, 64
    %v478 = vld [vmem:[%s477] sm:$0xff]
    %v479 = vld [vmem:[%s477 + $0x8] sm:$0xff]
    %v480 = vld [vmem:[%s477 + $0x10] sm:$0xff]
    %v481 = vld [vmem:[%s477 + $0x18] sm:$0xff]
    %v486 = vrot.slane %v474, 7
    %v487 = vsel %vm411, %v486, %v473
    %v488 = vrot.slane %v475, 6
    %v489 = vsel %vm414, %v488, %v487
    %v490 = vrot.slane %v476, 5
    %v491 = vsel %vm417, %v490, %v489
    %v492 = vsel %vm168, %v491, 0
    %494 = vmatpush.msra.mxu0 0.0
    %495 = vmatpush.msra.mxu0 0.0
    %496 = vmatpush.msra.mxu0 0.0
    %497 = vmatpush.msra.mxu0 0.0
    %498 = vmatpush.msra.mxu0 0.0
    %499 = vmatpush.msra.mxu0 0.0
    %500 = vmatpush.msra.mxu0 0.0
    %501 = vmatpush.msra.mxu0 0.0
    %502 = vmatpush.msra.mxu0 0.0
    %503 = vmatpush.msra.mxu0 0.0
    %504 = vmatpush.msra.mxu0 0.0
    %505 = vmatpush.msra.mxu0 0.0
    %506 = vmatpush.msra.mxu0 %v481
    %507 = vmatpush.msra.mxu0 %v480
    %508 = vmatpush.msra.mxu0 %v479
    %509 = vmatpush.msra.mxu0 %v478
    %510 = vmatmul.f32.gmra.mxu0 %v492
    %v511 = vpop.f32.mrf.mxu0
    %v512 = vadd.f32 0.0, %v511
    %513 = vdwg.mxu0
    %v514 = vadd.f32 %v471, %v512
    %v515 = vld [vmem:[#allocation2 + $0x3] sm:$0x1]
    %v516 = vld [vmem:[#allocation2 + $0x7] sm:$0x1]
    %v517 = vld [vmem:[#allocation2 + $0xb] sm:$0x1]
    %v518 = vld [vmem:[#allocation2 + $0xf] sm:$0x1]
    %s519 = scalar_lea.vmem %s6, 96
    %v520 = vld [vmem:[%s519] sm:$0xff]
    %v521 = vld [vmem:[%s519 + $0x8] sm:$0xff]
    %v522 = vld [vmem:[%s519 + $0x10] sm:$0xff]
    %v523 = vld [vmem:[%s519 + $0x18] sm:$0xff]
    %v528 = vrot.slane %v516, 7
    %v529 = vsel %vm411, %v528, %v515
    %v530 = vrot.slane %v517, 6
    %v531 = vsel %vm414, %v530, %v529
    %v532 = vrot.slane %v518, 5
    %v533 = vsel %vm417, %v532, %v531
    %v534 = vsel %vm168, %v533, 0
    %536 = vmatpush.msra.mxu0 0.0
    %537 = vmatpush.msra.mxu0 0.0
    %538 = vmatpush.msra.mxu0 0.0
    %539 = vmatpush.msra.mxu0 0.0
    %540 = vmatpush.msra.mxu0 0.0
    %541 = vmatpush.msra.mxu0 0.0
    %542 = vmatpush.msra.mxu0 0.0
    %543 = vmatpush.msra.mxu0 0.0
    %544 = vmatpush.msra.mxu0 0.0
    %545 = vmatpush.msra.mxu0 0.0
    %546 = vmatpush.msra.mxu0 0.0
    %547 = vmatpush.msra.mxu0 0.0
    %548 = vmatpush.msra.mxu0 %v523
    %549 = vmatpush.msra.mxu0 %v522
    %550 = vmatpush.msra.mxu0 %v521
    %551 = vmatpush.msra.mxu0 %v520
    %552 = vmatmul.f32.gmra.mxu0 %v534
    %v553 = vpop.f32.mrf.mxu0
    %v554 = vadd.f32 0.0, %v553
    %555 = vdwg.mxu0
    %v556 = vadd.f32 %v514, %v554
    %v557 = vld [vmem:[%s1] sm:$0xff]
    %v558 = vld [vmem:[%s1 + $0x8] sm:$0xff]
    %v559 = vld [vmem:[%s1 + $0x10] sm:$0xff]
    %v560 = vld [vmem:[%s1 + $0x18] sm:$0xff]
    %v561 = vld [vmem:[%s5] sm:$0xff]
    %v562 = vld [vmem:[%s5 + $0x8] sm:$0xff]
    %v563 = vld [vmem:[%s5 + $0x10] sm:$0xff]
    %v564 = vld [vmem:[%s5 + $0x18] sm:$0xff]
    %v565 = vld [vmem:[%s5 + $0x20] sm:$0xff]
    %v566 = vld [vmem:[%s5 + $0x28] sm:$0xff]
    %v567 = vld [vmem:[%s5 + $0x30] sm:$0xff]
    %v568 = vld [vmem:[%s5 + $0x38] sm:$0xff]
    %v569 = vld [vmem:[%s5 + $0x40] sm:$0x3]
    %v570 = vld [vmem:[%s5 + $0x48] sm:$0x3]
    %v571 = vld [vmem:[%s5 + $0x50] sm:$0x3]
    %v572 = vld [vmem:[%s5 + $0x58] sm:$0x3]
    %v573 = vld [vmem:[%s5 + $0x60] sm:$0x3]
    %v574 = vld [vmem:[%s5 + $0x68] sm:$0x3]
    %v575 = vld [vmem:[%s5 + $0x70] sm:$0x3]
    %v576 = vld [vmem:[%s5 + $0x78] sm:$0x3]
    %581 = vst [vmem:[#allocation1] ss:$2 sm:$0xff] %v557
    %s582 = scalar_lea.vmem [#allocation1], 16
    %583 = vst [vmem:[%s582] ss:$2 sm:$0xff] %v558
    %s584 = scalar_lea.vmem [#allocation1], 32
    %585 = vst [vmem:[%s584] ss:$2 sm:$0xff] %v559
    %s586 = scalar_lea.vmem [#allocation1], 48
    %587 = vst [vmem:[%s586] ss:$2 sm:$0xff] %v560
    %v588 = vld.sshfl [vmem:[#allocation1] sm:$0xff pattern:$0x75316420]
    %v589 = vld.sshfl [vmem:[#allocation1 + $0x8] sm:$0xff pattern:$0x75316420]
    %v590 = vld.sshfl [vmem:[#allocation1 + $0x10] sm:$0xff pattern:$0x75316420]
    %v591 = vld.sshfl [vmem:[#allocation1 + $0x18] sm:$0xff pattern:$0x75316420]
    %v592 = vld.sshfl [vmem:[#allocation1 + $0x20] sm:$0xff pattern:$0x75316420]
    %v593 = vld.sshfl [vmem:[#allocation1 + $0x28] sm:$0xff pattern:$0x75316420]
    %v594 = vld.sshfl [vmem:[#allocation1 + $0x30] sm:$0xff pattern:$0x75316420]
    %v595 = vld.sshfl [vmem:[#allocation1 + $0x38] sm:$0xff pattern:$0x75316420]
    %vm603 = vcmask 850944
    %v604 = vsel %vm603, %v595, 0
    %v607 = vsel %vm603, %v568, 0
    %v610 = vsel %vm603, %v576, 0
    %612 = vmatpush.xpose.msra.mxu0 0.0
    %613 = vmatpush.xpose.msra.mxu0 0.0
    %614 = vmatpush.xpose.msra.mxu0 0.0
    %615 = vmatpush.xpose.msra.mxu0 0.0
    %616 = vmatpush.xpose.msra.mxu0 0.0
    %617 = vmatpush.xpose.msra.mxu0 0.0
    %618 = vmatpush.xpose.msra.mxu0 0.0
    %619 = vmatpush.xpose.msra.mxu0 0.0
    %620 = vmatpush.xpose.msra.mxu0 0.0
    %621 = vmatpush.xpose.msra.mxu0 0.0
    %622 = vmatpush.xpose.msra.mxu0 0.0
    %623 = vmatpush.xpose.msra.mxu0 0.0
    %624 = vmatpush.xpose.msra.mxu0 0.0
    %625 = vmatpush.xpose.msra.mxu0 0.0
    %626 = vmatpush.xpose.msra.mxu0 %v569
    %627 = vmatpush.xpose.msra.mxu0 %v561
    %628 = vmatmul.f32.gmra.mxu0 %v588
    %v629 = vpop.f32.mrf.mxu0
    %v630 = vadd.f32 %v556, %v629
    %631 = vdwg.mxu0
    %632 = vmatpush.xpose.msra.mxu0 0.0
    %633 = vmatpush.xpose.msra.mxu0 0.0
    %634 = vmatpush.xpose.msra.mxu0 0.0
    %635 = vmatpush.xpose.msra.mxu0 0.0
    %636 = vmatpush.xpose.msra.mxu0 0.0
    %637 = vmatpush.xpose.msra.mxu0 0.0
    %638 = vmatpush.xpose.msra.mxu0 0.0
    %639 = vmatpush.xpose.msra.mxu0 0.0
    %640 = vmatpush.xpose.msra.mxu0 0.0
    %641 = vmatpush.xpose.msra.mxu0 0.0
    %642 = vmatpush.xpose.msra.mxu0 0.0
    %643 = vmatpush.xpose.msra.mxu0 0.0
    %644 = vmatpush.xpose.msra.mxu0 0.0
    %645 = vmatpush.xpose.msra.mxu0 0.0
    %646 = vmatpush.xpose.msra.mxu0 %v570
    %647 = vmatpush.xpose.msra.mxu0 %v562
    %648 = vmatmul.f32.gmra.mxu0 %v589
    %v649 = vpop.f32.mrf.mxu0
    %v650 = vadd.f32 %v630, %v649
    %651 = vdwg.mxu0
    %652 = vmatpush.xpose.msra.mxu0 0.0
    %653 = vmatpush.xpose.msra.mxu0 0.0
    %654 = vmatpush.xpose.msra.mxu0 0.0
    %655 = vmatpush.xpose.msra.mxu0 0.0
    %656 = vmatpush.xpose.msra.mxu0 0.0
    %657 = vmatpush.xpose.msra.mxu0 0.0
    %658 = vmatpush.xpose.msra.mxu0 0.0
    %659 = vmatpush.xpose.msra.mxu0 0.0
    %660 = vmatpush.xpose.msra.mxu0 0.0
    %661 = vmatpush.xpose.msra.mxu0 0.0
    %662 = vmatpush.xpose.msra.mxu0 0.0
    %663 = vmatpush.xpose.msra.mxu0 0.0
    %664 = vmatpush.xpose.msra.mxu0 0.0
    %665 = vmatpush.xpose.msra.mxu0 0.0
    %666 = vmatpush.xpose.msra.mxu0 %v571
    %667 = vmatpush.xpose.msra.mxu0 %v563
    %668 = vmatmul.f32.gmra.mxu0 %v590
    %v669 = vpop.f32.mrf.mxu0
    %v670 = vadd.f32 %v650, %v669
    %671 = vdwg.mxu0
    %672 = vmatpush.xpose.msra.mxu0 0.0
    %673 = vmatpush.xpose.msra.mxu0 0.0
    %674 = vmatpush.xpose.msra.mxu0 0.0
    %675 = vmatpush.xpose.msra.mxu0 0.0
    %676 = vmatpush.xpose.msra.mxu0 0.0
    %677 = vmatpush.xpose.msra.mxu0 0.0
    %678 = vmatpush.xpose.msra.mxu0 0.0
    %679 = vmatpush.xpose.msra.mxu0 0.0
    %680 = vmatpush.xpose.msra.mxu0 0.0
    %681 = vmatpush.xpose.msra.mxu0 0.0
    %682 = vmatpush.xpose.msra.mxu0 0.0
    %683 = vmatpush.xpose.msra.mxu0 0.0
    %684 = vmatpush.xpose.msra.mxu0 0.0
    %685 = vmatpush.xpose.msra.mxu0 0.0
    %686 = vmatpush.xpose.msra.mxu0 %v572
    %687 = vmatpush.xpose.msra.mxu0 %v564
    %688 = vmatmul.f32.gmra.mxu0 %v591
    %v689 = vpop.f32.mrf.mxu0
    %v690 = vadd.f32 %v670, %v689
    %691 = vdwg.mxu0
    %692 = vmatpush.xpose.msra.mxu0 0.0
    %693 = vmatpush.xpose.msra.mxu0 0.0
    %694 = vmatpush.xpose.msra.mxu0 0.0
    %695 = vmatpush.xpose.msra.mxu0 0.0
    %696 = vmatpush.xpose.msra.mxu0 0.0
    %697 = vmatpush.xpose.msra.mxu0 0.0
    %698 = vmatpush.xpose.msra.mxu0 0.0
    %699 = vmatpush.xpose.msra.mxu0 0.0
    %700 = vmatpush.xpose.msra.mxu0 0.0
    %701 = vmatpush.xpose.msra.mxu0 0.0
    %702 = vmatpush.xpose.msra.mxu0 0.0
    %703 = vmatpush.xpose.msra.mxu0 0.0
    %704 = vmatpush.xpose.msra.mxu0 0.0
    %705 = vmatpush.xpose.msra.mxu0 0.0
    %706 = vmatpush.xpose.msra.mxu0 %v573
    %707 = vmatpush.xpose.msra.mxu0 %v565
    %708 = vmatmul.f32.gmra.mxu0 %v592
    %v709 = vpop.f32.mrf.mxu0
    %v710 = vadd.f32 %v690, %v709
    %711 = vdwg.mxu0
    %712 = vmatpush.xpose.msra.mxu0 0.0
    %713 = vmatpush.xpose.msra.mxu0 0.0
    %714 = vmatpush.xpose.msra.mxu0 0.0
    %715 = vmatpush.xpose.msra.mxu0 0.0
    %716 = vmatpush.xpose.msra.mxu0 0.0
    %717 = vmatpush.xpose.msra.mxu0 0.0
    %718 = vmatpush.xpose.msra.mxu0 0.0
    %719 = vmatpush.xpose.msra.mxu0 0.0
    %720 = vmatpush.xpose.msra.mxu0 0.0
    %721 = vmatpush.xpose.msra.mxu0 0.0
    %722 = vmatpush.xpose.msra.mxu0 0.0
    %723 = vmatpush.xpose.msra.mxu0 0.0
    %724 = vmatpush.xpose.msra.mxu0 0.0
    %725 = vmatpush.xpose.msra.mxu0 0.0
    %726 = vmatpush.xpose.msra.mxu0 %v574
    %727 = vmatpush.xpose.msra.mxu0 %v566
    %728 = vmatmul.f32.gmra.mxu0 %v593
    %v729 = vpop.f32.mrf.mxu0
    %v730 = vadd.f32 %v710, %v729
    %731 = vdwg.mxu0
    %732 = vmatpush.xpose.msra.mxu0 0.0
    %733 = vmatpush.xpose.msra.mxu0 0.0
    %734 = vmatpush.xpose.msra.mxu0 0.0
    %735 = vmatpush.xpose.msra.mxu0 0.0
    %736 = vmatpush.xpose.msra.mxu0 0.0
    %737 = vmatpush.xpose.msra.mxu0 0.0
    %738 = vmatpush.xpose.msra.mxu0 0.0
    %739 = vmatpush.xpose.msra.mxu0 0.0
    %740 = vmatpush.xpose.msra.mxu0 0.0
    %741 = vmatpush.xpose.msra.mxu0 0.0
    %742 = vmatpush.xpose.msra.mxu0 0.0
    %743 = vmatpush.xpose.msra.mxu0 0.0
    %744 = vmatpush.xpose.msra.mxu0 0.0
    %745 = vmatpush.xpose.msra.mxu0 0.0
    %746 = vmatpush.xpose.msra.mxu0 %v575
    %747 = vmatpush.xpose.msra.mxu0 %v567
    %748 = vmatmul.f32.gmra.mxu0 %v594
    %v749 = vpop.f32.mrf.mxu0
    %v750 = vadd.f32 %v730, %v749
    %751 = vdwg.mxu0
    %752 = vmatpush.xpose.msra.mxu0 0.0
    %753 = vmatpush.xpose.msra.mxu0 0.0
    %754 = vmatpush.xpose.msra.mxu0 0.0
    %755 = vmatpush.xpose.msra.mxu0 0.0
    %756 = vmatpush.xpose.msra.mxu0 0.0
    %757 = vmatpush.xpose.msra.mxu0 0.0
    %758 = vmatpush.xpose.msra.mxu0 0.0
    %759 = vmatpush.xpose.msra.mxu0 0.0
    %760 = vmatpush.xpose.msra.mxu0 0.0
    %761 = vmatpush.xpose.msra.mxu0 0.0
    %762 = vmatpush.xpose.msra.mxu0 0.0
    %763 = vmatpush.xpose.msra.mxu0 0.0
    %764 = vmatpush.xpose.msra.mxu0 0.0
    %765 = vmatpush.xpose.msra.mxu0 0.0
    %766 = vmatpush.xpose.msra.mxu0 %v610
    %767 = vmatpush.xpose.msra.mxu0 %v607
    %768 = vmatmul.f32.gmra.mxu0 %v604
    %v769 = vpop.f32.mrf.mxu0
    %v770 = vadd.f32 %v750, %v769
    %771 = vdwg.mxu0
    %v772 = vld [vmem:[%s7] sm:$0x1]
    %v774 = vperm.slane %v772, 0
    %v776 = vadd.f32 %v770, %v774
    %vm777 = vcmask 76800
    %778 = vst.msk [vmem:[#allocation9] sm:$0xf] %vm777, %v776
    // Predicated region
    $region46: #{tpu_custom_call.1} parent=1 // pred_check
      _
    $region47: #{tpu_custom_call.1} parent=1 // pred_check_branch
      %780 = sbr.rel (0) target = $region49
    $region48: #{tpu_custom_call.1} parent=1 // pred_region
      %782 = vsyncadd [#allocation5], 0
      %s784 = sshll.u32 [#allocation9], 4
      %s785 = int_to_ptr.vmem [resolvable:$true] %s784
      %s786 = sshll.u32 %s8, 4
      %s787 = int_to_ptr.hbm [resolvable:$true] %s786
      %789 = dma.vmem_to_hbm [thread:$0]  %s785, 64, %s787, [#allocation5]
    $region49: #{tpu_custom_call.1} parent=1 // pred_fallthru
      _
    // Predicated region
    $region50: #{tpu_custom_call.1} parent=1 // pred_check
      _
    $region51: #{tpu_custom_call.1} parent=1 // pred_check_branch
      %791 = sbr.rel (0) target = $region53
    $region52: #{tpu_custom_call.1} parent=1 // pred_region
      %793 = dma.done [#allocation5], 64
    $region53: #{tpu_custom_call.1} parent=1 // pred_fallthru
      _
    %794 = vsyncpa [#allocation4], 1
    %795 = vsyncpa [#allocation7], 1
    %796 = vsyncpa [#allocation5], 1

</llo_original>
